<compile_context>
chip_gen: v6e
topology: v6e:2x2x1
jax: 0.10.0
libtpu: 0.0.40
codegen_flags: <defaults>
</compile_context>

<pallas_src>
import functools

import jax
import jax.numpy as jnp
from jax.experimental import pallas as pl
from jax.experimental.pallas import tpu as pltpu

SUBLANE_F32 = 8  # f32 second-to-last-dim tiling unit


def _round_up(n, m):
    return ((n + m - 1) // m) * m


def _apply_activation(t, activation):
    if activation == 'sigmoid':
        return jax.nn.sigmoid(t)
    if activation == 'tanh':
        return jnp.tanh(t)
    return jnp.maximum(t, 0.0)  # 'relu' and the PyTorch fallback branch


def _net1_kernel(x_ref, w_eff_ref, b_eff_ref, w_pred_ref, b_pred_ref, out_ref,
                 *, activation):
    # hidden_0 .. hidden_3 collapsed into one affine map (composed wrapper-side).
    t = jnp.dot(x_ref[...], w_eff_ref[...],
                preferred_element_type=jnp.float32) + b_eff_ref[...]
    # activation only before `predict`
    t = _apply_activation(t, activation)
    # predict
    t = jnp.dot(t, w_pred_ref[...],
                preferred_element_type=jnp.float32) + b_pred_ref[...]
    out_ref[...] = t.astype(out_ref.dtype)


def net1_forward(x, params, *, activation='relu', tm=1024):
    """Net1 forward.

    x      : (batch, n_features) f32
    params : list of 5 (W, b) pairs, W shaped (in, out) = PyTorch W.T,
             b shaped (1, out); all f32.
    """
    (w0, b0), (w1, b1), (w2, b2), (w3, b3), (w4, b4) = params
    batch, n_features = x.shape
    n_hidden = w0.shape[1]
    n_output = w4.shape[1]

    # ---- collapse the four activation-free layers (exact algebra, f32) ----
    w_eff = w0 @ w1 @ w2 @ w3                          # (n_features, n_hidden)
    b_eff = ((b0 @ w1 + b1) @ w2 + b2) @ w3 + b3       # (1, n_hidden)
    w_pred = w4                                        # (n_hidden, n_output)
    b_pred = b4                                        # (1, n_output)

    # ---- batch tiling ------------------------------------------------------
    batch_r = _round_up(batch, SUBLANE_F32)
    tm_eff = max(SUBLANE_F32, min(_round_up(tm, SUBLANE_F32), batch_r))
    # v7x megacore: keep >= 2 grid steps when the batch allows it so the
    # "parallel" batch axis can be split across both TensorCores.
    if batch_r > SUBLANE_F32 and tm_eff >= batch_r:
        tm_eff = _round_up((batch + 1) // 2, SUBLANE_F32)
    batch_pad = _round_up(batch, tm_eff)
    n_tiles = batch_pad // tm_eff

    # Only the batch dim is padded (zero rows are sliced off at the end).
    x_p = jnp.pad(x, ((0, batch_pad - batch), (0, 0))).astype(jnp.float32)

    # ---- block specs (x / out tiled on batch; weights VMEM-resident) -------
    x_spec = pl.BlockSpec((tm_eff, n_features), lambda i: (i, 0))
    out_spec = pl.BlockSpec((tm_eff, n_output), lambda i: (i, 0))

    def resident(a):  # full-array block, same block index every grid step
        return pl.BlockSpec(a.shape, lambda i: (0, 0))

    weights = [w_eff, b_eff, w_pred, b_pred]
    in_specs = [x_spec] + [resident(a) for a in weights]

    # ---- cost estimate + right-sized VMEM limit -----------------------------
    flops = 2 * batch_pad * (n_features * n_hidden + n_hidden * n_output)
    transcendentals = batch_pad * n_hidden if activation in ('sigmoid', 'tanh') else 0
    w_bytes = sum(int(a.size) * a.dtype.itemsize for a in weights)
    bytes_accessed = int(x_p.size) * 4 + batch_pad * n_output * 4 + w_bytes
    tile_bytes = tm_eff * (n_features + n_hidden + n_output) * 4
    vmem_limit = min(128 << 20, 2 * (w_bytes + tile_bytes) + (2 << 20))

    out = pl.pallas_call(
        functools.partial(_net1_kernel, activation=activation),
        out_shape=jax.ShapeDtypeStruct((batch_pad, n_output), jnp.float32),
        grid=(n_tiles,),
        in_specs=in_specs,
        out_specs=out_spec,
        compiler_params=pltpu.CompilerParams(
            dimension_semantics=("parallel",),
            vmem_limit_bytes=int(vmem_limit),
        ),
        cost_estimate=pl.CostEstimate(
            flops=flops,
            transcendentals=transcendentals,
            bytes_accessed=bytes_accessed,
        ),
    )(x_p, *weights)

    return out[:batch, :]


def init_linear(key, n_in, n_out):
    """Deterministic init mimicking torch.nn.Linear: U(-1/sqrt(n_in), 1/sqrt(n_in))."""
    kw, kb = jax.random.split(key)
    bound = 1.0 / jnp.sqrt(jnp.float32(n_in))
    # Stored as (in, out) = transpose of PyTorch's (out, in).
    w = jax.random.uniform(kw, (n_in, n_out), jnp.float32, -bound, bound)
    b = jax.random.uniform(kb, (1, n_out), jnp.float32, -bound, bound)
    return w, b


def reference_forward(x, params, activation='relu'):
    """Pure-JAX f32 reference with the un-collapsed 5-layer structure."""
    (w0, b0), (w1, b1), (w2, b2), (w3, b3), (w4, b4) = params
    t = x @ w0 + b0
    t = t @ w1 + b1
    t = t @ w2 + b2
    t = t @ w3 + b3
    t = _apply_activation(t, activation)
    return t @ w4 + b4


if __name__ == "__main__":
    batch, n_features, n_hidden, n_output = 16, 8, 32, 4

    key = jax.random.PRNGKey(0)
    keys = jax.random.split(key, 6)
    x = jax.random.normal(keys[0], (batch, n_features), jnp.float32)

    dims = [(n_features, n_hidden),
            (n_hidden, n_hidden),
            (n_hidden, n_hidden),
            (n_hidden, n_hidden),
            (n_hidden, n_output)]
    params = [init_linear(k, din, dout) for k, (din, dout) in zip(keys[1:], dims)]

    out = net1_forward(x, params, activation='relu')
    out = jax.block_until_ready(out)

    ref = reference_forward(x, params, activation='relu')
    assert out.shape == (batch, n_output), out.shape
    assert jnp.allclose(out, ref, atol=1e-4, rtol=1e-4), (
        f"max abs err {jnp.max(jnp.abs(out - ref))}")

    print("KERNEL_OK")
</pallas_src>

<mosaic_0001>
module attributes {stable_mosaic.version = 11 : i64} {
  func.func @_net1_kernel(%arg0: i32, %arg1: memref<8x8xf32, #tpu.memory_space<vmem>>, %arg2: memref<8x32xf32, #tpu.memory_space<vmem>>, %arg3: memref<1x32xf32, #tpu.memory_space<vmem>>, %arg4: memref<32x4xf32, #tpu.memory_space<vmem>>, %arg5: memref<1x4xf32, #tpu.memory_space<vmem>>, %arg6: memref<8x4xf32, #tpu.memory_space<vmem>>) attributes {dimension_semantics = [#tpu.dimension_semantics<parallel>], iteration_bounds = array<i64: 2>, scalar_prefetch = 0 : i64, scratch_operands = 0 : i64, tpu.core_type = #tpu.core_type<tc>, window_params = [{transform_indices = @transform_0, window_bounds = array<i64: 8, 8>}, {pipeline_mode = #tpu.pipeline_mode<synchronous>, transform_indices = @transform_1, window_bounds = array<i64: 8, 32>}, {pipeline_mode = #tpu.pipeline_mode<synchronous>, transform_indices = @transform_2, window_bounds = array<i64: 1, 32>}, {pipeline_mode = #tpu.pipeline_mode<synchronous>, transform_indices = @transform_3, window_bounds = array<i64: 32, 4>}, {pipeline_mode = #tpu.pipeline_mode<synchronous>, transform_indices = @transform_4, window_bounds = array<i64: 1, 4>}, {transform_indices = @transform_5, window_bounds = array<i64: 8, 4>}]} {
    %c0 = arith.constant 0 : index
    %c0_0 = arith.constant 0 : index
    %0 = vector.load %arg1[%c0, %c0_0] : memref<8x8xf32, #tpu.memory_space<vmem>>, vector<8x8xf32>
    %c0_1 = arith.constant 0 : index
    %c0_2 = arith.constant 0 : index
    %1 = vector.load %arg2[%c0_1, %c0_2] : memref<8x32xf32, #tpu.memory_space<vmem>>, vector<8x32xf32>
    %cst = arith.constant dense<0.000000e+00> : vector<8x32xf32>
    %2 = tpu.matmul %0, %1, %cst {dimension_numbers = #tpu.dot_dimension_numbers<[1], [0], [0], [1], [0, 0, 1, 1], [], []>} : vector<8x8xf32>, vector<8x32xf32>, vector<8x32xf32> -> vector<8x32xf32>
    %c0_3 = arith.constant 0 : index
    %c0_4 = arith.constant 0 : index
    %3 = vector.load %arg3[%c0_3, %c0_4] : memref<1x32xf32, #tpu.memory_space<vmem>>, vector<1x32xf32>
    %4 = vector.broadcast %3 : vector<1x32xf32> to vector<8x32xf32>
    %5 = arith.addf %2, %4 : vector<8x32xf32>
    %cst_5 = arith.constant 0.000000e+00 : f32
    %6 = vector.broadcast %cst_5 : f32 to vector<8x32xf32>
    %7 = arith.maximumf %5, %6 : vector<8x32xf32>
    %c0_6 = arith.constant 0 : index
    %c0_7 = arith.constant 0 : index
    %8 = vector.load %arg4[%c0_6, %c0_7] : memref<32x4xf32, #tpu.memory_space<vmem>>, vector<32x4xf32>
    %cst_8 = arith.constant dense<0.000000e+00> : vector<8x4xf32>
    %9 = tpu.matmul %7, %8, %cst_8 {dimension_numbers = #tpu.dot_dimension_numbers<[1], [0], [0], [1], [0, 0, 1, 1], [], []>} : vector<8x32xf32>, vector<32x4xf32>, vector<8x4xf32> -> vector<8x4xf32>
    %c0_9 = arith.constant 0 : index
    %c0_10 = arith.constant 0 : index
    %10 = vector.load %arg5[%c0_9, %c0_10] : memref<1x4xf32, #tpu.memory_space<vmem>>, vector<1x4xf32>
    %11 = vector.broadcast %10 : vector<1x4xf32> to vector<8x4xf32>
    %12 = arith.addf %9, %11 : vector<8x4xf32>
    %c0_11 = arith.constant 0 : index
    %c0_12 = arith.constant 0 : index
    %13 = vector.load %arg6[%c0_11, %c0_12] : memref<8x4xf32, #tpu.memory_space<vmem>>, vector<8x4xf32>
    tpu.vector_store %arg6[%c0_11, %c0_12], %12 {strides = array<i32>} : memref<8x4xf32, #tpu.memory_space<vmem>>, vector<8x4xf32>,
    return
  }
  func.func @transform_0(%arg0: i32) -> (i32, i32) {
    %c0_i32 = arith.constant 0 : i32
    %c0_i32_0 = arith.constant 0 : i32
    return %arg0, %c0_i32 : i32, i32
  }
  func.func @transform_1(%arg0: i32) -> (i32, i32) {
    %c0_i32 = arith.constant 0 : i32
    %c0_i32_0 = arith.constant 0 : i32
    %c0_i32_1 = arith.constant 0 : i32
    return %c0_i32, %c0_i32_0 : i32, i32
  }
  func.func @transform_2(%arg0: i32) -> (i32, i32) {
    %c0_i32 = arith.constant 0 : i32
    %c0_i32_0 = arith.constant 0 : i32
    %c0_i32_1 = arith.constant 0 : i32
    return %c0_i32, %c0_i32_0 : i32, i32
  }
  func.func @transform_3(%arg0: i32) -> (i32, i32) {
    %c0_i32 = arith.constant 0 : i32
    %c0_i32_0 = arith.constant 0 : i32
    %c0_i32_1 = arith.constant 0 : i32
    return %c0_i32, %c0_i32_0 : i32, i32
  }
  func.func @transform_4(%arg0: i32) -> (i32, i32) {
    %c0_i32 = arith.constant 0 : i32
    %c0_i32_0 = arith.constant 0 : i32
    %c0_i32_1 = arith.constant 0 : i32
    return %c0_i32, %c0_i32_0 : i32, i32
  }
  func.func @transform_5(%arg0: i32) -> (i32, i32) {
    %c0_i32 = arith.constant 0 : i32
    %c0_i32_0 = arith.constant 0 : i32
    return %arg0, %c0_i32 : i32, i32
  }
}

</mosaic_0001>

<llo_original>
// kernel: tpu_custom_call.1
$region0: #{tpu_custom_call.1}
  #allocation0 [shape = 'u32[]', space=smem, size = 0x4, offset = 0x4, fixed_abs, tag = 'smem constant byte address 0x4 - core index']
  #allocation1 [shape = 'u32[144,128]{1,0:T(1,128)}', space=vmem, size = 0x12000, scoped, tag = 'internal scratch']
  %s0 = inlined_call_operand.vmem [shape: f32[16,8], index: 0, kind: input, shape index: {}]
  %s1 = inlined_call_operand.vmem [shape: f32[8,32], index: 1, kind: input, shape index: {}]
  %s2 = inlined_call_operand.vmem [shape: f32[1,32], index: 2, kind: input, shape index: {}]
  %s3 = inlined_call_operand.vmem [shape: f32[32,4], index: 3, kind: input, shape index: {}]
  %s4 = inlined_call_operand.vmem [shape: f32[1,4], index: 4, kind: input, shape index: {}]
  %s5 = inlined_call_operand.vmem [shape: f32[16,4], index: 5, kind: output, shape index: {}]
  %s6 = sld [smem:[#allocation0]]
  $region53: #{tpu_custom_call.1} parent=0
    _
  %s8 = ssub.s32 1, %s6
  %s9 = scalar_select 0, %s8, %s6
  loop: start=0, step=1, limit=4
  $region2: #{tpu_custom_call.1} parent=0 // loop_pre_header
    _
  $region3: #{tpu_custom_call.1} parent=0 // loop_header
    %s11 = sphi 0, %s15
    %p12 = scmp.ge.s32.totalorder %s11, 4
    %s21 = sphi 0, %s23
    %s24 = sphi 0, %s21
    %s25 = sphi 0, %s24
    %s41 = sphi 0, %s25
    %s45 = sphi 0, %s45
    %s47 = sphi 0, %s45
    %s48 = sphi 0, %s47
    %s62 = sphi 0, %s48
    %s66 = sphi 0, %s66
    %s68 = sphi 0, %s66
    %s69 = sphi 0, %s68
    %s83 = sphi 0, %s69
    %s87 = sphi 0, %s87
    %s89 = sphi 0, %s87
    %s90 = sphi 0, %s89
    %s104 = sphi 0, %s90
    %s108 = sphi 0, %s108
    %s110 = sphi 0, %s108
    %s111 = sphi 0, %s110
    %s125 = sphi 0, %s111
    %s131 = sphi 0, %s133
    %s134 = sphi 0, %s131
    %s135 = sphi 0, %s134
    %s151 = sphi 0, %s135
  $region4: #{tpu_custom_call.1} parent=0 // loop_header_branch
    %14 = sbr.rel (%p12) target = $region8
  $region5: #{tpu_custom_call.1} parent=0 // loop_body
    %s16 = ssub.s32 %s11, 1
    %s17 = ssub.s32 %s11, 2
    %s18 = sadd.s32 %s11, 1
    %s19 = ssub.s32 %s11, %s18
    %p20 = scmp.eq.s32.totalorder %s19, 0
    %s22 = sadd.s32 %s21, 1
    %s23 = scalar_select %p20, %s21, %s22
    %p26 = pneg %p20
    %p27 = scmp.eq.s32.totalorder %s11, 1
    %p28 = por %p26, %p27
    %p29 = scmp.ne.s32.totalorder %s21, %s24
    %p30 = scmp.eq.s32.totalorder %s11, 0
    %p31 = por %p29, %p30
    %p32 = scmp.ne.s32.totalorder %s21, %s24
    %p33 = scmp.eq.s32.totalorder %s16, 1
    %p34 = por %p32, %p33
    %p35 = scmp.ne.s32.totalorder %s24, %s25
    %p36 = scmp.eq.s32.totalorder %s16, 0
    %p37 = por %p35, %p36
    %p38 = scmp.ne.s32.totalorder %s24, %s25
    %p39 = scmp.eq.s32.totalorder %s17, 1
    %p40 = por %p38, %p39
    %p42 = scmp.ne.s32.totalorder %s25, %s41
    %p43 = scmp.eq.s32.totalorder %s17, 0
    %p44 = por %p42, %p43
    %s46 = sadd.s32 %s45, 1
    %p49 = scmp.eq.s32.totalorder %s11, 1
    %p50 = scmp.ne.s32.totalorder %s45, %s47
    %p51 = scmp.eq.s32.totalorder %s11, 0
    %p52 = por %p50, %p51
    %p53 = scmp.ne.s32.totalorder %s45, %s47
    %p54 = scmp.eq.s32.totalorder %s16, 1
    %p55 = por %p53, %p54
    %p56 = scmp.ne.s32.totalorder %s47, %s48
    %p57 = scmp.eq.s32.totalorder %s16, 0
    %p58 = por %p56, %p57
    %p59 = scmp.ne.s32.totalorder %s47, %s48
    %p60 = scmp.eq.s32.totalorder %s17, 1
    %p61 = por %p59, %p60
    %p63 = scmp.ne.s32.totalorder %s48, %s62
    %p64 = scmp.eq.s32.totalorder %s17, 0
    %p65 = por %p63, %p64
    %s67 = sadd.s32 %s66, 1
    %p70 = scmp.eq.s32.totalorder %s11, 1
    %p71 = scmp.ne.s32.totalorder %s66, %s68
    %p72 = scmp.eq.s32.totalorder %s11, 0
    %p73 = por %p71, %p72
    %p74 = scmp.ne.s32.totalorder %s66, %s68
    %p75 = scmp.eq.s32.totalorder %s16, 1
    %p76 = por %p74, %p75
    %p77 = scmp.ne.s32.totalorder %s68, %s69
    %p78 = scmp.eq.s32.totalorder %s16, 0
    %p79 = por %p77, %p78
    %p80 = scmp.ne.s32.totalorder %s68, %s69
    %p81 = scmp.eq.s32.totalorder %s17, 1
    %p82 = por %p80, %p81
    %p84 = scmp.ne.s32.totalorder %s69, %s83
    %p85 = scmp.eq.s32.totalorder %s17, 0
    %p86 = por %p84, %p85
    %s88 = sadd.s32 %s87, 1
    %p91 = scmp.eq.s32.totalorder %s11, 1
    %p92 = scmp.ne.s32.totalorder %s87, %s89
    %p93 = scmp.eq.s32.totalorder %s11, 0
    %p94 = por %p92, %p93
    %p95 = scmp.ne.s32.totalorder %s87, %s89
    %p96 = scmp.eq.s32.totalorder %s16, 1
    %p97 = por %p95, %p96
    %p98 = scmp.ne.s32.totalorder %s89, %s90
    %p99 = scmp.eq.s32.totalorder %s16, 0
    %p100 = por %p98, %p99
    %p101 = scmp.ne.s32.totalorder %s89, %s90
    %p102 = scmp.eq.s32.totalorder %s17, 1
    %p103 = por %p101, %p102
    %p105 = scmp.ne.s32.totalorder %s90, %s104
    %p106 = scmp.eq.s32.totalorder %s17, 0
    %p107 = por %p105, %p106
    %s109 = sadd.s32 %s108, 1
    %p112 = scmp.eq.s32.totalorder %s11, 1
    %p113 = scmp.ne.s32.totalorder %s108, %s110
    %p114 = scmp.eq.s32.totalorder %s11, 0
    %p115 = por %p113, %p114
    %p116 = scmp.ne.s32.totalorder %s108, %s110
    %p117 = scmp.eq.s32.totalorder %s16, 1
    %p118 = por %p116, %p117
    %p119 = scmp.ne.s32.totalorder %s110, %s111
    %p120 = scmp.eq.s32.totalorder %s16, 0
    %p121 = por %p119, %p120
    %p122 = scmp.ne.s32.totalorder %s110, %s111
    %p123 = scmp.eq.s32.totalorder %s17, 1
    %p124 = por %p122, %p123
    %p126 = scmp.ne.s32.totalorder %s111, %s125
    %p127 = scmp.eq.s32.totalorder %s17, 0
    %p128 = por %p126, %p127
    %s129 = ssub.s32 %s11, %s18
    %p130 = scmp.eq.s32.totalorder %s129, 0
    %s132 = sadd.s32 %s131, 1
    %s133 = scalar_select %p130, %s131, %s132
    %p136 = pneg %p130
    %p137 = scmp.eq.s32.totalorder %s11, 1
    %p138 = por %p136, %p137
    %p139 = scmp.ne.s32.totalorder %s131, %s134
    %p140 = scmp.eq.s32.totalorder %s11, 0
    %p141 = por %p139, %p140
    %p142 = scmp.ne.s32.totalorder %s131, %s134
    %p143 = scmp.eq.s32.totalorder %s16, 1
    %p144 = por %p142, %p143
    %p145 = scmp.ne.s32.totalorder %s134, %s135
    %p146 = scmp.eq.s32.totalorder %s16, 0
    %p147 = por %p145, %p146
    %p148 = scmp.ne.s32.totalorder %s134, %s135
    %p149 = scmp.eq.s32.totalorder %s17, 1
    %p150 = por %p148, %p149
    %p152 = scmp.ne.s32.totalorder %s135, %s151
    %p153 = scmp.eq.s32.totalorder %s17, 0
    %p154 = por %p152, %p153
    %p155 = scmp.le.s32.totalorder 1, %s11
    %p156 = scmp.lt.s32.totalorder %s11, 3
    %p157 = pnand %p155, %p156
    %p158 = pneg %p157
    // Predicated region
    $region9: #{tpu_custom_call.1} parent=5 // pred_check
      _
    $region10: #{tpu_custom_call.1} parent=5 // pred_check_branch
      %160 = sbr.rel (%p157) target = $region12
    $region11: #{tpu_custom_call.1} parent=5 // pred_region
      %s161 = ssub.s32 %s11, 1
      // Predicated region
      $region13: #{tpu_custom_call.1} parent=11 // pred_check
        %p162 = pneg %p58
      $region14: #{tpu_custom_call.1} parent=11 // pred_check_branch
        %164 = sbr.rel (%p162) target = $region16
      $region15: #{tpu_custom_call.1} parent=11 // pred_region
        _
      $region16: #{tpu_custom_call.1} parent=11 // pred_fallthru
        _
      // Predicated region
      $region17: #{tpu_custom_call.1} parent=11 // pred_check
        %p165 = pneg %p79
      $region18: #{tpu_custom_call.1} parent=11 // pred_check_branch
        %167 = sbr.rel (%p165) target = $region20
      $region19: #{tpu_custom_call.1} parent=11 // pred_region
        _
      $region20: #{tpu_custom_call.1} parent=11 // pred_fallthru
        _
      // Predicated region
      $region21: #{tpu_custom_call.1} parent=11 // pred_check
        %p168 = pneg %p100
      $region22: #{tpu_custom_call.1} parent=11 // pred_check_branch
        %170 = sbr.rel (%p168) target = $region24
      $region23: #{tpu_custom_call.1} parent=11 // pred_region
        _
      $region24: #{tpu_custom_call.1} parent=11 // pred_fallthru
        _
      // Predicated region
      $region25: #{tpu_custom_call.1} parent=11 // pred_check
        %p171 = pneg %p121
      $region26: #{tpu_custom_call.1} parent=11 // pred_check_branch
        %173 = sbr.rel (%p171) target = $region28
      $region27: #{tpu_custom_call.1} parent=11 // pred_region
        _
      $region28: #{tpu_custom_call.1} parent=11 // pred_fallthru
        _
    $region12: #{tpu_custom_call.1} parent=5 // pred_fallthru
      _
    %p174 = scmp.lt.s32.totalorder %s11, 2
    // Predicated region
    $region29: #{tpu_custom_call.1} parent=5 // pred_check
      %p175 = pneg %p174
    $region30: #{tpu_custom_call.1} parent=5 // pred_check_branch
      %177 = sbr.rel (%p175) target = $region32
    $region31: #{tpu_custom_call.1} parent=5 // pred_region
      // Predicated region
      $region33: #{tpu_custom_call.1} parent=31 // pred_check
        %p178 = pneg %p31
      $region34: #{tpu_custom_call.1} parent=31 // pred_check_branch
        %180 = sbr.rel (%p178) target = $region36
      $region35: #{tpu_custom_call.1} parent=31 // pred_region
        %p181 = scmp.lt.s32.totalorder %s11, 1
        %s182 = scalar_select %p181, %s11, 1
        %s183 = smul.addr %s182, 8
        %s184 = scalar_lea.vmem %s0, %s183
      $region36: #{tpu_custom_call.1} parent=31 // pred_fallthru
        _
    $region32: #{tpu_custom_call.1} parent=5 // pred_fallthru
      _
    %p185 = scmp.le.s32.totalorder 1, %s11
    %p186 = scmp.lt.s32.totalorder %s11, 3
    %p187 = pnand %p185, %p186
    %p188 = pneg %p187
    // Predicated region
    $region37: #{tpu_custom_call.1} parent=5 // pred_check
      _
    $region38: #{tpu_custom_call.1} parent=5 // pred_check_branch
      %190 = sbr.rel (%p187) target = $region40
    $region39: #{tpu_custom_call.1} parent=5 // pred_region
      %s191 = ssub.s32 %s11, 1
      %p192 = scmp.lt.s32.totalorder %s16, 1
      %s193 = scalar_select %p192, %s16, 1
      %s194 = smul.addr %s193, 8
      %s195 = scalar_lea.vmem %s0, %s194
      %p196 = pneg %p37
      %p197 = pneg %p34
      %p198 = pneg %p58
      %p199 = pneg %p55
      %p200 = pneg %p79
      %p201 = pneg %p76
      %p202 = pneg %p100
      %p203 = pneg %p97
      %p204 = pneg %p121
      %p205 = pneg %p118
      %p206 = pneg %p147
      %p207 = pneg %p144
      %p208 = scmp.lt.s32.totalorder %s16, 1
      %s209 = scalar_select %p208, %s16, 1
      %s210 = smul.addr %s209, 8
      %s211 = scalar_lea.vmem %s5, %s210
      %p212 = scmp.lt.s32.totalorder %s16, 1
      %s213 = scalar_select %p212, %s16, 1
      %s214 = smul.addr %s213, 8
      %s215 = scalar_lea.vmem %s0, %s214
      %p216 = scmp.lt.s32.totalorder %s16, 1
      %s217 = scalar_select %p216, %s16, 1
      %s218 = smul.addr %s217, 8
      %s219 = scalar_lea.vmem %s5, %s218
      %v220 = vld [vmem:[%s215] sm:$0xff]
      %v221 = vld [vmem:[%s1] sm:$0xff]
      %v222 = vld [vmem:[%s2] sm:$0x1]
      %v224 = vlaneseq
      %v225 = vshrl.u32 %v224, 7
      %v226 = vsub.s32 0, %v225
      %v227 = vrot.slane %v222, %v226
      %vm229 = vcmask 64512
      %v231 = vsel %vm229, %v220, 0
      %233 = vmatprep.subr.mxu0 0.0
      %234 = vmatpush1.msra.mxu0 0.0
      %235 = vmatprep.subr.mxu0 0.0
      %236 = vmatpush1.msra.mxu0 0.0
      %237 = vmatprep.subr.mxu0 0.0
      %238 = vmatpush1.msra.mxu0 0.0
      %239 = vmatprep.subr.mxu0 0.0
      %240 = vmatpush1.msra.mxu0 0.0
      %241 = vmatprep.subr.mxu0 0.0
      %242 = vmatpush1.msra.mxu0 0.0
      %243 = vmatprep.subr.mxu0 0.0
      %244 = vmatpush1.msra.mxu0 0.0
      %245 = vmatprep.subr.mxu0 0.0
      %246 = vmatpush1.msra.mxu0 0.0
      %247 = vmatprep.subr.mxu0 0.0
      %248 = vmatpush1.msra.mxu0 0.0
      %249 = vmatprep.subr.mxu0 0.0
      %250 = vmatpush1.msra.mxu0 0.0
      %251 = vmatprep.subr.mxu0 0.0
      %252 = vmatpush1.msra.mxu0 0.0
      %253 = vmatprep.subr.mxu0 0.0
      %254 = vmatpush1.msra.mxu0 0.0
      %255 = vmatprep.subr.mxu0 0.0
      %256 = vmatpush1.msra.mxu0 0.0
      %257 = vmatprep.subr.mxu0 0.0
      %258 = vmatpush1.msra.mxu0 0.0
      %259 = vmatprep.subr.mxu0 0.0
      %260 = vmatpush1.msra.mxu0 0.0
      %261 = vmatprep.subr.mxu0 0.0
      %262 = vmatpush1.msra.mxu0 0.0
      %263 = vmatprep.subr.mxu0 0.0
      %264 = vmatpush1.msra.mxu0 %v221
      %265 = vmatprep.subr.mxu0 0.0
      %266 = vmatpush2.msra.mxu0 0.0
      %267 = vmatprep.subr.mxu0 0.0
      %268 = vmatpush2.msra.mxu0 0.0
      %269 = vmatprep.subr.mxu0 0.0
      %270 = vmatpush2.msra.mxu0 0.0
      %271 = vmatprep.subr.mxu0 0.0
      %272 = vmatpush2.msra.mxu0 0.0
      %273 = vmatprep.subr.mxu0 0.0
      %274 = vmatpush2.msra.mxu0 0.0
      %275 = vmatprep.subr.mxu0 0.0
      %276 = vmatpush2.msra.mxu0 0.0
      %277 = vmatprep.subr.mxu0 0.0
      %278 = vmatpush2.msra.mxu0 0.0
      %279 = vmatprep.subr.mxu0 0.0
      %280 = vmatpush2.msra.mxu0 0.0
      %281 = vmatprep.subr.mxu0 0.0
      %282 = vmatpush2.msra.mxu0 0.0
      %283 = vmatprep.subr.mxu0 0.0
      %284 = vmatpush2.msra.mxu0 0.0
      %285 = vmatprep.subr.mxu0 0.0
      %286 = vmatpush2.msra.mxu0 0.0
      %287 = vmatprep.subr.mxu0 0.0
      %288 = vmatpush2.msra.mxu0 0.0
      %289 = vmatprep.subr.mxu0 0.0
      %290 = vmatpush2.msra.mxu0 0.0
      %291 = vmatprep.subr.mxu0 0.0
      %292 = vmatpush2.msra.mxu0 0.0
      %293 = vmatprep.subr.mxu0 0.0
      %294 = vmatpush2.msra.mxu0 0.0
      %295 = vmatprep.subr.mxu0 0.0
      %296 = vmatpush2.msra.mxu0 0.0
      %297 = vmatprep.mubr.f32.mxu0 0.0
      %298 = vmatmul.mubr.f32.gmra.mxu0 %v231
      %v299 = vpop.f32.mrf.mxu0
      %v300 = vadd.f32 %v227, %v299
      %v301 = vpop.f32.mrf.mxu0
      %302 = vdwg.mxu0
      %v303 = vmax.f32 %v300, 0.0
      %v304 = vld [vmem:[%s3] sm:$0xff]
      %v305 = vld [vmem:[%s3 + $0x8] sm:$0xff]
      %v306 = vld [vmem:[%s3 + $0x10] sm:$0xff]
      %v307 = vld [vmem:[%s3 + $0x18] sm:$0xff]
      %v308 = vld [vmem:[%s4] sm:$0x1]
      %v310 = vlaneseq
      %v311 = vshrl.u32 %v310, 7
      %v312 = vsub.s32 0, %v311
      %v313 = vrot.slane %v308, %v312
      %vm315 = vcmask 261120
      %v317 = vsel %vm315, %v303, 0
      %319 = vmatprep.subr.mxu0 0.0
      %320 = vmatpush1.msra.mxu0 0.0
      %321 = vmatprep.subr.mxu0 0.0
      %322 = vmatpush1.msra.mxu0 0.0
      %323 = vmatprep.subr.mxu0 0.0
      %324 = vmatpush1.msra.mxu0 0.0
      %325 = vmatprep.subr.mxu0 0.0
      %326 = vmatpush1.msra.mxu0 0.0
      %327 = vmatprep.subr.mxu0 0.0
      %328 = vmatpush1.msra.mxu0 0.0
      %329 = vmatprep.subr.mxu0 0.0
      %330 = vmatpush1.msra.mxu0 0.0
      %331 = vmatprep.subr.mxu0 0.0
      %332 = vmatpush1.msra.mxu0 0.0
      %333 = vmatprep.subr.mxu0 0.0
      %334 = vmatpush1.msra.mxu0 0.0
      %335 = vmatprep.subr.mxu0 0.0
      %336 = vmatpush1.msra.mxu0 0.0
      %337 = vmatprep.subr.mxu0 0.0
      %338 = vmatpush1.msra.mxu0 0.0
      %339 = vmatprep.subr.mxu0 0.0
      %340 = vmatpush1.msra.mxu0 0.0
      %341 = vmatprep.subr.mxu0 0.0
      %342 = vmatpush1.msra.mxu0 0.0
      %343 = vmatprep.subr.mxu0 0.0
      %344 = vmatpush1.msra.mxu0 %v307
      %345 = vmatprep.subr.mxu0 0.0
      %346 = vmatpush1.msra.mxu0 %v306
      %347 = vmatprep.subr.mxu0 0.0
      %348 = vmatpush1.msra.mxu0 %v305
      %349 = vmatprep.subr.mxu0 0.0
      %350 = vmatpush1.msra.mxu0 %v304
      %351 = vmatprep.subr.mxu0 0.0
      %352 = vmatpush2.msra.mxu0 0.0
      %353 = vmatprep.subr.mxu0 0.0
      %354 = vmatpush2.msra.mxu0 0.0
      %355 = vmatprep.subr.mxu0 0.0
      %356 = vmatpush2.msra.mxu0 0.0
      %357 = vmatprep.subr.mxu0 0.0
      %358 = vmatpush2.msra.mxu0 0.0
      %359 = vmatprep.subr.mxu0 0.0
      %360 = vmatpush2.msra.mxu0 0.0
      %361 = vmatprep.subr.mxu0 0.0
      %362 = vmatpush2.msra.mxu0 0.0
      %363 = vmatprep.subr.mxu0 0.0
      %364 = vmatpush2.msra.mxu0 0.0
      %365 = vmatprep.subr.mxu0 0.0
      %366 = vmatpush2.msra.mxu0 0.0
      %367 = vmatprep.subr.mxu0 0.0
      %368 = vmatpush2.msra.mxu0 0.0
      %369 = vmatprep.subr.mxu0 0.0
      %370 = vmatpush2.msra.mxu0 0.0
      %371 = vmatprep.subr.mxu0 0.0
      %372 = vmatpush2.msra.mxu0 0.0
      %373 = vmatprep.subr.mxu0 0.0
      %374 = vmatpush2.msra.mxu0 0.0
      %375 = vmatprep.subr.mxu0 0.0
      %376 = vmatpush2.msra.mxu0 0.0
      %377 = vmatprep.subr.mxu0 0.0
      %378 = vmatpush2.msra.mxu0 0.0
      %379 = vmatprep.subr.mxu0 0.0
      %380 = vmatpush2.msra.mxu0 0.0
      %381 = vmatprep.subr.mxu0 0.0
      %382 = vmatpush2.msra.mxu0 0.0
      %383 = vmatprep.mubr.f32.mxu0 0.0
      %384 = vmatmul.mubr.f32.gmra.mxu0 %v317
      %v385 = vpop.f32.mrf.mxu0
      %v386 = vadd.f32 %v313, %v385
      %v387 = vpop.f32.mrf.mxu0
      %388 = vdwg.mxu0
      %vm389 = vcmask 31744
      %390 = vst.msk [vmem:[%s219] sm:$0xff] %vm389, %v386
      %p391 = scmp.lt.s32.totalorder %s16, 1
      %s392 = scalar_select %p391, %s16, 1
      %s393 = smul.addr %s392, 8
      %s394 = scalar_lea.vmem %s5, %s393
      // Predicated region
      $region41: #{tpu_custom_call.1} parent=39 // pred_check
        %p395 = pneg %p144
      $region42: #{tpu_custom_call.1} parent=39 // pred_check_branch
        %397 = sbr.rel (%p395) target = $region44
      $region43: #{tpu_custom_call.1} parent=39 // pred_region
        _
      $region44: #{tpu_custom_call.1} parent=39 // pred_fallthru
        _
    $region40: #{tpu_custom_call.1} parent=5 // pred_fallthru
      _
    %p398 = scmp.le.s32.totalorder 2, %s11
    // Predicated region
    $region45: #{tpu_custom_call.1} parent=5 // pred_check
      %p399 = pneg %p398
    $region46: #{tpu_custom_call.1} parent=5 // pred_check_branch
      %401 = sbr.rel (%p399) target = $region48
    $region47: #{tpu_custom_call.1} parent=5 // pred_region
      %s402 = ssub.s32 %s11, 2
      // Predicated region
      $region49: #{tpu_custom_call.1} parent=47 // pred_check
        %p403 = pneg %p150
      $region50: #{tpu_custom_call.1} parent=47 // pred_check_branch
        %405 = sbr.rel (%p403) target = $region52
      $region51: #{tpu_custom_call.1} parent=47 // pred_region
        %p406 = scmp.lt.s32.totalorder %s17, 1
        %s407 = scalar_select %p406, %s17, 1
        %s408 = smul.addr %s407, 8
        %s409 = scalar_lea.vmem %s5, %s408
      $region52: #{tpu_custom_call.1} parent=47 // pred_fallthru
        _
    $region48: #{tpu_custom_call.1} parent=5 // pred_fallthru
      _
  $region6: #{tpu_custom_call.1} parent=0 // loop_footer
    %s15 = sadd.s32 1, %s11
  $region7: #{tpu_custom_call.1} parent=0 // loop_footer_branch
    %10 = sbr.rel target = $region3
  $region8: #{tpu_custom_call.1} parent=0 // loop_exit
    _

</llo_original>
